<compile_context>
chip_gen: v7x
topology: tpu7x:2x2x1
jax: 0.10.0
libtpu: 0.0.40
codegen_flags: <defaults>
</compile_context>

<pallas_src>
import jax
import jax.numpy as jnp
from jax.experimental import pallas as pl
from jax.experimental.pallas import tpu as pltpu

_LANE = 128
_MAX_BLOCK_ROWS = 8192      # 8192 x 128 f32 = 4 MiB per input per grid step
_ROW_ALIGN = 32             # covers (8,128) f32, (16,128) bf16, (32,128) int8
_SINGLE_BLOCK_ROWS = 64     # below this, one full-extent block


def _round_up(x, m):
    return -(-x // m) * m


def _silog_partial_kernel(est_ref, gt_ref, mask_ref, out_ref):
    """Per-block, per-lane partial sums: [sum(d); sum(d*d); count]."""
    valid = mask_ref[...] != 0
    # Masked elements (and any out-of-bounds garbage in a partial est/gt edge
    # block) are replaced by 1.0 before the log, so they contribute d = 0.
    est = jnp.where(valid, est_ref[...].astype(jnp.float32), 1.0)
    gt = jnp.where(valid, gt_ref[...].astype(jnp.float32), 1.0)
    d = jnp.log(est) - jnp.log(gt)

    out_ref[0, 0:1, :] = jnp.sum(d, axis=0, keepdims=True)
    out_ref[0, 1:2, :] = jnp.sum(d * d, axis=0, keepdims=True)
    out_ref[0, 2:3, :] = jnp.sum(valid.astype(jnp.float32), axis=0, keepdims=True)


def silog_loss_pallas(depth_est, depth_gt, mask, variance_focus):
    # Stream est/gt in their native floating dtype (kernel upcasts to f32);
    # only non-float inputs get converted in the wrapper.
    if not jnp.issubdtype(depth_est.dtype, jnp.floating):
        depth_est = depth_est.astype(jnp.float32)
    if not jnp.issubdtype(depth_gt.dtype, jnp.floating):
        depth_gt = depth_gt.astype(jnp.float32)

    est = depth_est.reshape(-1)
    gt = depth_gt.reshape(-1)
    m = mask.reshape(-1).astype(jnp.int8)   # bool->int8 fuses with pad/reshape
    n = est.shape[0]

    rows = pl.cdiv(n, _LANE)

    # Adaptive tiling: big blocks amortize per-step overhead; keep >=2 blocks
    # on non-tiny inputs so the parallel grid axis can split across v7x cores.
    if rows < _SINGLE_BLOCK_ROWS:
        block_rows = rows
        num_blocks = 1
    else:
        num_blocks = max(2, pl.cdiv(rows, _MAX_BLOCK_ROWS))
        block_rows = _round_up(pl.cdiv(rows, num_blocks), _ROW_ALIGN)
        num_blocks = pl.cdiv(rows, block_rows)
    grid_rows = num_blocks * block_rows

    # est/gt: minimal pad (to a lane multiple) so the flat stream reshapes to
    # (rows, 128); garbage in their partial last block is masked in-kernel.
    pad = rows * _LANE - n
    if pad:
        est = jnp.pad(est, (0, pad))
        gt = jnp.pad(gt, (0, pad))
    # Mask: zero-pad to the full grid extent (int8, cheap) so the kernel needs
    # no bounds checks at all.
    mask_pad = grid_rows * _LANE - n
    if mask_pad:
        m = jnp.pad(m, (0, mask_pad))

    est = est.reshape(rows, _LANE)
    gt = gt.reshape(rows, _LANE)
    m = m.reshape(grid_rows, _LANE)

    partial_sums = pl.pallas_call(
        _silog_partial_kernel,
        out_shape=jax.ShapeDtypeStruct((num_blocks, 3, _LANE), jnp.float32),
        grid=(num_blocks,),
        in_specs=[
            pl.BlockSpec((block_rows, _LANE), lambda i: (i, 0)),
            pl.BlockSpec((block_rows, _LANE), lambda i: (i, 0)),
            pl.BlockSpec((block_rows, _LANE), lambda i: (i, 0)),
        ],
        out_specs=pl.BlockSpec((1, 3, _LANE), lambda i: (i, 0, 0)),
        compiler_params=pltpu.CompilerParams(
            dimension_semantics=("parallel",),
            vmem_limit_bytes=48 * 1024 * 1024,
        ),
    )(est, gt, m)

    # Tiny epilogue in plain JAX: combine per-block/per-lane partial sums.
    sums = jnp.sum(partial_sums, axis=(0, 2))       # [sum_d, sum_d2, count]
    # NOTE: all-False mask -> PyTorch reference yields NaN (0/0); here the
    # count is clamped so the loss degrades to 0.0 instead.
    cnt = jnp.maximum(sums[2], 1.0)
    mean_d = sums[0] / cnt
    mean_d2 = sums[1] / cnt
    # NOTE: clamp guards tiny negative values from catastrophic cancellation;
    # the reference would surface those as NaN.
    var_term = jnp.maximum(mean_d2 - variance_focus * mean_d * mean_d, 0.0)
    return jnp.sqrt(var_term) * 10.0


def silog_loss_ref(depth_est, depth_gt, mask, variance_focus):
    m = mask.astype(jnp.float32)
    est = jnp.where(mask, depth_est.astype(jnp.float32), 1.0)
    gt = jnp.where(mask, depth_gt.astype(jnp.float32), 1.0)
    d = (jnp.log(est) - jnp.log(gt)) * m
    cnt = jnp.sum(m)
    mean_d = jnp.sum(d) / cnt
    mean_d2 = jnp.sum(d * d) / cnt
    return jnp.sqrt(mean_d2 - variance_focus * mean_d ** 2) * 10.0


if __name__ == "__main__":
    variance_focus = 0.85   # DDNLoss default
    key = jax.random.PRNGKey(0)
    keys = jax.random.split(key, 9)

    # Small test (single full-extent block) — depth maps [B, H, W].
    shape = (2, 16, 16)
    depth_est = jax.random.uniform(keys[0], shape, jnp.float32, minval=1.0, maxval=10.0)
    depth_gt = jax.random.uniform(keys[1], shape, jnp.float32, minval=1.0, maxval=10.0)
    mask = jax.random.uniform(keys[2], shape, jnp.float32) > 0.3

    loss = silog_loss_pallas(depth_est, depth_gt, mask, variance_focus)
    jax.block_until_ready(loss)
    ref = silog_loss_ref(depth_est, depth_gt, mask, variance_focus)
    assert jnp.allclose(loss, ref, rtol=1e-4, atol=1e-4), (loss, ref)

    # Larger test exercising the multi-block + ragged-tail path.
    shape2 = (3, 300, 400)
    depth_est2 = jax.random.uniform(keys[3], shape2, jnp.float32, minval=0.5, maxval=20.0)
    depth_gt2 = jax.random.uniform(keys[4], shape2, jnp.float32, minval=0.5, maxval=20.0)
    mask2 = jax.random.uniform(keys[5], shape2, jnp.float32) > 0.5

    loss2 = silog_loss_pallas(depth_est2, depth_gt2, mask2, variance_focus)
    jax.block_until_ready(loss2)
    ref2 = silog_loss_ref(depth_est2, depth_gt2, mask2, variance_focus)
    assert jnp.allclose(loss2, ref2, rtol=1e-4, atol=1e-4), (loss2, ref2)

    # bf16 inputs streamed natively (2 B/elem) + ragged tail + partial edge block.
    shape3 = (2, 97, 130)
    depth_est3 = jax.random.uniform(keys[6], shape3, jnp.float32,
                                    minval=0.5, maxval=20.0).astype(jnp.bfloat16)
    depth_gt3 = jax.random.uniform(keys[7], shape3, jnp.float32,
                                   minval=0.5, maxval=20.0).astype(jnp.bfloat16)
    mask3 = jax.random.uniform(keys[8], shape3, jnp.float32) > 0.4

    loss3 = silog_loss_pallas(depth_est3, depth_gt3, mask3, variance_focus)
    jax.block_until_ready(loss3)
    ref3 = silog_loss_ref(depth_est3, depth_gt3, mask3, variance_focus)
    assert jnp.allclose(loss3, ref3, rtol=1e-3, atol=1e-3), (loss3, ref3)

    print("KERNEL_OK")
</pallas_src>

<mosaic_0001>
module attributes {stable_mosaic.version = 11 : i64} {
  func.func @_silog_partial_kernel(%arg0: i32, %arg1: memref<4x128xf32, #tpu.memory_space<vmem>>, %arg2: memref<4x128xf32, #tpu.memory_space<vmem>>, %arg3: memref<4x128xi8, #tpu.memory_space<vmem>>, %arg4: memref<1x3x128xf32, #tpu.memory_space<vmem>>) attributes {dimension_semantics = [#tpu.dimension_semantics<parallel>], iteration_bounds = array<i64: 1>, scalar_prefetch = 0 : i64, scratch_operands = 0 : i64, tpu.core_type = #tpu.core_type<tc>, window_params = [{transform_indices = @transform_0, window_bounds = array<i64: 4, 128>}, {transform_indices = @transform_1, window_bounds = array<i64: 4, 128>}, {transform_indices = @transform_2, window_bounds = array<i64: 4, 128>}, {transform_indices = @transform_3, window_bounds = array<i64: 1, 3, 128>}]} {
    %c0 = arith.constant 0 : index
    %c0_0 = arith.constant 0 : index
    %0 = vector.load %arg3[%c0, %c0_0] : memref<4x128xi8, #tpu.memory_space<vmem>>, vector<4x128xi8>
    %c0_i8 = arith.constant 0 : i8
    %1 = vector.broadcast %c0_i8 : i8 to vector<4x128xi8>
    %2 = arith.cmpi ne, %0, %1 : vector<4x128xi8>
    %c0_1 = arith.constant 0 : index
    %c0_2 = arith.constant 0 : index
    %3 = vector.load %arg1[%c0_1, %c0_2] : memref<4x128xf32, #tpu.memory_space<vmem>>, vector<4x128xf32>
    %cst = arith.constant 1.000000e+00 : f32
    %4 = vector.broadcast %cst : f32 to vector<4x128xf32>
    %5 = arith.select %2, %3, %4 : vector<4x128xi1>, vector<4x128xf32>
    %c0_3 = arith.constant 0 : index
    %c0_4 = arith.constant 0 : index
    %6 = vector.load %arg2[%c0_3, %c0_4] : memref<4x128xf32, #tpu.memory_space<vmem>>, vector<4x128xf32>
    %cst_5 = arith.constant 1.000000e+00 : f32
    %7 = vector.broadcast %cst_5 : f32 to vector<4x128xf32>
    %8 = arith.select %2, %6, %7 : vector<4x128xi1>, vector<4x128xf32>
    %9 = math.log %5 : vector<4x128xf32>
    %10 = math.log %8 : vector<4x128xf32>
    %11 = arith.subf %9, %10 : vector<4x128xf32>
    %cst_6 = arith.constant dense<0.000000e+00> : vector<128xf32>
    %12 = vector.multi_reduction <add>, %11, %cst_6 [0] : vector<4x128xf32> to vector<128xf32>
    %13 = vector.shape_cast %12 : vector<128xf32> to vector<1x128xf32>
    %c0_7 = arith.constant 0 : index
    %c0_8 = arith.constant 0 : index
    %c0_9 = arith.constant 0 : index
    %14 = vector.load %arg4[%c0_7, %c0_8, %c0_9] : memref<1x3x128xf32, #tpu.memory_space<vmem>>, vector<1x1x128xf32>
    %15 = vector.shape_cast %14 : vector<1x1x128xf32> to vector<1x128xf32>
    %16 = vector.shape_cast %13 : vector<1x128xf32> to vector<1x1x128xf32>
    tpu.vector_store %arg4[%c0_7, %c0_8, %c0_9], %16 {strides = array<i32>} : memref<1x3x128xf32, #tpu.memory_space<vmem>>, vector<1x1x128xf32>,
    %17 = arith.mulf %11, %11 : vector<4x128xf32>
    %cst_10 = arith.constant dense<0.000000e+00> : vector<128xf32>
    %18 = vector.multi_reduction <add>, %17, %cst_10 [0] : vector<4x128xf32> to vector<128xf32>
    %19 = vector.shape_cast %18 : vector<128xf32> to vector<1x128xf32>
    %c0_11 = arith.constant 0 : index
    %c1 = arith.constant 1 : index
    %c0_12 = arith.constant 0 : index
    %20 = vector.load %arg4[%c0_11, %c1, %c0_12] : memref<1x3x128xf32, #tpu.memory_space<vmem>>, vector<1x1x128xf32>
    %21 = vector.shape_cast %20 : vector<1x1x128xf32> to vector<1x128xf32>
    %22 = vector.shape_cast %19 : vector<1x128xf32> to vector<1x1x128xf32>
    tpu.vector_store %arg4[%c0_11, %c1, %c0_12], %22 {strides = array<i32>} : memref<1x3x128xf32, #tpu.memory_space<vmem>>, vector<1x1x128xf32>,
    %23 = arith.extui %2 : vector<4x128xi1> to vector<4x128xi32>
    %24 = arith.sitofp %23 : vector<4x128xi32> to vector<4x128xf32>
    %cst_13 = arith.constant dense<0.000000e+00> : vector<128xf32>
    %25 = vector.multi_reduction <add>, %24, %cst_13 [0] : vector<4x128xf32> to vector<128xf32>
    %26 = vector.shape_cast %25 : vector<128xf32> to vector<1x128xf32>
    %c0_14 = arith.constant 0 : index
    %c2 = arith.constant 2 : index
    %c0_15 = arith.constant 0 : index
    %27 = vector.load %arg4[%c0_14, %c2, %c0_15] : memref<1x3x128xf32, #tpu.memory_space<vmem>>, vector<1x1x128xf32>
    %28 = vector.shape_cast %27 : vector<1x1x128xf32> to vector<1x128xf32>
    %29 = vector.shape_cast %26 : vector<1x128xf32> to vector<1x1x128xf32>
    tpu.vector_store %arg4[%c0_14, %c2, %c0_15], %29 {strides = array<i32>} : memref<1x3x128xf32, #tpu.memory_space<vmem>>, vector<1x1x128xf32>,
    return
  }
  func.func @transform_0(%arg0: i32) -> (i32, i32) {
    %c0_i32 = arith.constant 0 : i32
    %c0_i32_0 = arith.constant 0 : i32
    return %arg0, %c0_i32 : i32, i32
  }
  func.func @transform_1(%arg0: i32) -> (i32, i32) {
    %c0_i32 = arith.constant 0 : i32
    %c0_i32_0 = arith.constant 0 : i32
    return %arg0, %c0_i32 : i32, i32
  }
  func.func @transform_2(%arg0: i32) -> (i32, i32) {
    %c0_i32 = arith.constant 0 : i32
    %c0_i32_0 = arith.constant 0 : i32
    return %arg0, %c0_i32 : i32, i32
  }
  func.func @transform_3(%arg0: i32) -> (i32, i32, i32) {
    %c0_i32 = arith.constant 0 : i32
    %c0_i32_0 = arith.constant 0 : i32
    %c0_i32_1 = arith.constant 0 : i32
    return %arg0, %c0_i32, %c0_i32_0 : i32, i32, i32
  }
}

</mosaic_0001>

<llo_original>
// kernel: tpu_custom_call.1
$region0: #{tpu_custom_call.1}
  #allocation0 [shape = 'u32[]', space=smem, size = 0x4, offset = 0x4, fixed_abs, tag = 'smem constant byte address 0x4 - core index']
  #allocation1 [shape = 'u32[144,128]{1,0:T(1,128)}', space=vmem, size = 0x12000, scoped, tag = 'internal scratch']
  %s0 = inlined_call_operand.hbm [shape: f32[4,128], index: 0, kind: input, shape index: {}]
  %s1 = inlined_call_operand.hbm [shape: f32[4,128], index: 1, kind: input, shape index: {}]
  %s2 = inlined_call_operand.vmem [shape: s8[4,128], index: 2, kind: input, shape index: {}]
  %s3 = inlined_call_operand.vmem [shape: f32[1,3,128], index: 3, kind: output, shape index: {}]
  %s4 = sld [smem:[#allocation0]]
  $region30: #{tpu_custom_call.1} parent=0
    _
  %s6 = ssub.s32 1, %s4
  %s7 = scalar_select 0, %s6, %s4
  $region1: #{tpu_custom_call.1} parent=0
    #allocation2 [shape = 'u8[2048]{0}', space=vmem, size = 0x800, scoped, tag = 'input window, operand 0, single buffered']
    #allocation3 [shape = 's32[1]{0}', space=sflag, size = 0x4, scoped, tag = 'scoped memory for tpu_custom_call.1']
    #allocation4 [shape = 'u8[2048]{0}', space=vmem, size = 0x800, scoped, tag = 'input window, operand 1, single buffered']
    #allocation5 [shape = 's32[1]{0}', space=sflag, size = 0x4, scoped, tag = 'scoped memory for tpu_custom_call.1']
    %8 = vsyncpa [#allocation3], 0
    %9 = vsyncpa [#allocation5], 0
    // Predicated region
    $region2: #{tpu_custom_call.1} parent=1 // pred_check
      _
    $region3: #{tpu_custom_call.1} parent=1 // pred_check_branch
      %11 = sbr.rel (0) target = $region5
    $region4: #{tpu_custom_call.1} parent=1 // pred_region
      %s13 = ssub.s32 64, 64
      %14 = vsyncadd [#allocation3], %s13
      %s16 = sshll.u32 [#allocation2], 4
      %s17 = int_to_ptr.vmem [resolvable:$true] %s16
      %19 = dma.hbm_to_vmem [thread:$0]  %s0, 64, %s17, [#allocation3]
    $region5: #{tpu_custom_call.1} parent=1 // pred_fallthru
      _
    // Predicated region
    $region6: #{tpu_custom_call.1} parent=1 // pred_check
      _
    $region7: #{tpu_custom_call.1} parent=1 // pred_check_branch
      %21 = sbr.rel (0) target = $region9
    $region8: #{tpu_custom_call.1} parent=1 // pred_region
      %s23 = ssub.s32 64, 64
      %24 = vsyncadd [#allocation5], %s23
      %s26 = sshll.u32 [#allocation4], 4
      %s27 = int_to_ptr.vmem [resolvable:$true] %s26
      %29 = dma.hbm_to_vmem [thread:$0]  %s1, 64, %s27, [#allocation5]
    $region9: #{tpu_custom_call.1} parent=1 // pred_fallthru
      _
    // Predicated region
    $region10: #{tpu_custom_call.1} parent=1 // pred_check
      _
    $region11: #{tpu_custom_call.1} parent=1 // pred_check_branch
      %31 = sbr.rel (0) target = $region13
    $region12: #{tpu_custom_call.1} parent=1 // pred_region
      _
    $region13: #{tpu_custom_call.1} parent=1 // pred_fallthru
      _
    // Predicated region
    $region14: #{tpu_custom_call.1} parent=1 // pred_check
      _
    $region15: #{tpu_custom_call.1} parent=1 // pred_check_branch
      %33 = sbr.rel (0) target = $region17
    $region16: #{tpu_custom_call.1} parent=1 // pred_region
      %34 = dma.done [#allocation3], 64
    $region17: #{tpu_custom_call.1} parent=1 // pred_fallthru
      _
    // Predicated region
    $region18: #{tpu_custom_call.1} parent=1 // pred_check
      _
    $region19: #{tpu_custom_call.1} parent=1 // pred_check_branch
      %36 = sbr.rel (0) target = $region21
    $region20: #{tpu_custom_call.1} parent=1 // pred_region
      %37 = dma.done [#allocation5], 64
    $region21: #{tpu_custom_call.1} parent=1 // pred_fallthru
      _
    %v40 = vld [vmem:[%s2] sm:$0x1]
    %vm41 = vnez %v40
    %v42 = vld [vmem:[#allocation2] sm:$0xf]
    %v43 = vsel %vm41, 16843009, 0
    %v44 = vunpack.c.0.s8 %v43
    %vm45 = vcmp.ne.s32.totalorder %v44, 0
    %v46 = vsel %vm45, %v42, 1.0
    %v47 = vld [vmem:[#allocation4] sm:$0xf]
    %v48 = vsel %vm45, %v47, 1.0
    %v49 = vlog2.pop %v46
    %v50 = vmul.f32 %v49, 0.6931472
    %v51 = vlog2.pop %v48
    %v52 = vmul.f32 %v51, 0.6931472
    %v53 = vsub.f32 %v50, %v52
    %vm54 = vcmask 1043456
    %v55 = vsel %vm54, %v53, 0.0
    %v56 = vrot.slane %v55, 4
    %v57 = vadd.f32 %v55, %v56
    %v58 = vrot.slane %v57, 2
    %v59 = vadd.f32 %v57, %v58
    %v60 = vrot.slane %v59, 1
    %v61 = vadd.f32 %v59, %v60
    %62 = vst [vmem:[%s3] sm:$0x1] %v61
    %v63 = vmul.f32 %v53, %v53
    %v64 = vsel %vm54, %v63, 0.0
    %v65 = vrot.slane %v64, 4
    %v66 = vadd.f32 %v64, %v65
    %v67 = vrot.slane %v66, 2
    %v68 = vadd.f32 %v66, %v67
    %v69 = vrot.slane %v68, 1
    %v70 = vadd.f32 %v68, %v69
    %71 = vst [vmem:[%s3 + $0x1] sm:$0x1] %v70
    %v72 = vsel %vm45, 1, 0
    %v73 = vcvt.s32.f32 %v72
    %v74 = vsel %vm54, %v73, 0.0
    %v75 = vrot.slane %v74, 4
    %v76 = vadd.f32 %v74, %v75
    %v77 = vrot.slane %v76, 2
    %v78 = vadd.f32 %v76, %v77
    %v79 = vrot.slane %v78, 1
    %v80 = vadd.f32 %v78, %v79
    %81 = vst [vmem:[%s3 + $0x2] sm:$0x1] %v80
    // Predicated region
    $region22: #{tpu_custom_call.1} parent=1 // pred_check
      _
    $region23: #{tpu_custom_call.1} parent=1 // pred_check_branch
      %83 = sbr.rel (0) target = $region25
    $region24: #{tpu_custom_call.1} parent=1 // pred_region
      _
    $region25: #{tpu_custom_call.1} parent=1 // pred_fallthru
      _
    // Predicated region
    $region26: #{tpu_custom_call.1} parent=1 // pred_check
      _
    $region27: #{tpu_custom_call.1} parent=1 // pred_check_branch
      %85 = sbr.rel (0) target = $region29
    $region28: #{tpu_custom_call.1} parent=1 // pred_region
      _
    $region29: #{tpu_custom_call.1} parent=1 // pred_fallthru
      _
    %86 = vsyncpa [#allocation3], 1
    %87 = vsyncpa [#allocation5], 1

</llo_original>
